<compile_context>
chip_gen: v7x
topology: tpu7x:2x2x1
jax: 0.10.0
libtpu: 0.0.40
codegen_flags: <defaults>
</compile_context>

<pallas_src>
import functools

import numpy as np
import jax
import jax.numpy as jnp
from jax import lax
from jax.experimental import pallas as pl
from jax.experimental.pallas import tpu as pltpu

_SOFTPLUS_THRESHOLD = 20.0  # torch.nn.Softplus default (beta=1)


def _softplus(x):
    return jnp.where(x > _SOFTPLUS_THRESHOLD, x,
                     jnp.log1p(jnp.exp(jnp.minimum(x, _SOFTPLUS_THRESHOLD))))


def _round_up(x, m):
    return (x + m - 1) // m * m


def _pick_hw_tile(hw, cin, cout, cp, act_bytes, out_bytes, max_hw_tile,
                  vmem_budget_bytes):
    """Largest lane-aligned HW tile fitting the VMEM budget, + padded HW."""
    # Rough per-HW-lane VMEM bytes across both passes (incl. double-buffered
    # streamed tiles and the f32 intermediates / compute-dtype copies).
    per_lane = (2 * cin * act_bytes                 # dbuf input activation tile
                + (2 * cp + 8) * (4 + act_bytes)    # kv1 f32 + compute-dtype copy
                + (cp + 8) * 4                      # v_ext / combined
                + cout * (4 + act_bytes)            # k / q
                + 2 * cout * out_bytes)             # dbuf pass-2 output tile
    budget = max(vmem_budget_bytes - (2 << 20), 1 << 20)   # weight headroom
    t_cap = max(128, (budget // per_lane) // 128 * 128)
    tile = min(_round_up(hw, 128), int(max_hw_tile), t_cap)
    tile = max(128, (tile // 128) * 128)
    hw_padded = _round_up(hw, tile)
    return tile, hw_padded, per_lane


# --------------------------------------------------------------------------
# Pass 1: source-path projections + fused global-context reduction (S and Z)
# --------------------------------------------------------------------------
def _context_kernel(src_ref, wkv1_ref, bkv1_ref, wk2_ref, bk2_ref, sz_ref,
                    *, cp, hw, tile, compute_dtype):
    t = pl.program_id(2)

    @pl.when(t == 0)
    def _():
        sz_ref[0] = jnp.zeros(sz_ref.shape[1:], sz_ref.dtype)

    x = src_ref[0]                                         # [Cin, T] compute dtype

    # fused first layer: key_project conv1 | ones-rows | value_project
    kv1 = jnp.dot(wkv1_ref[...], x, preferred_element_type=jnp.float32)
    kv1 = jnp.maximum(kv1 + bkv1_ref[...], 0.0)            # [2*Cp+8, T], f32

    k1 = kv1[:cp]            # key after conv1 + ReLU          (8-aligned slice)
    v_ext = kv1[cp:]         # [ones(8) ; value]   [Cp+8, T]   (8-aligned slice)

    # key_project second conv (+folded BN) + Softplus
    k = jnp.dot(wk2_ref[...], k1.astype(compute_dtype),
                preferred_element_type=jnp.float32) + bk2_ref[...]
    k = _softplus(k)                                        # [Cout, T], f32

    if hw % tile != 0:
        # mask the zero-padded HW lanes out of the reduction
        nt_inner = pl.num_programs(2)
        start = (pl.program_id(0) * nt_inner + t) * tile
        lane = lax.broadcasted_iota(jnp.int32, (1, tile), 1) + start
        k = jnp.where(lane < hw, k, 0.0)

    # SZ[r, d] += sum_hw v_ext[r, hw] * k[d, hw]
    #   rows 0..7 -> Z^T (identical ones rows); rows 8.. -> S = V K^T
    sz_ref[0] += lax.dot_general(
        v_ext.astype(compute_dtype), k.astype(compute_dtype),
        (((1,), (1,)), ((), ())), preferred_element_type=jnp.float32)


# --------------------------------------------------------------------------
# Pass 2: query projection + apply global context
# --------------------------------------------------------------------------
def _apply_kernel(tgt_ref, wq1_ref, bq1_ref, wq2_ref, bq2_ref, sz_ref, out_ref,
                  *, eps, compute_dtype, approx_recip):
    x = tgt_ref[0]                                          # [Cin, T]

    q1 = jnp.dot(wq1_ref[...], x, preferred_element_type=jnp.float32)
    q1 = jnp.maximum(q1 + bq1_ref[...], 0.0)                # [Cp, T], f32
    q = jnp.dot(wq2_ref[...], q1.astype(compute_dtype),
                preferred_element_type=jnp.float32) + bq2_ref[...]
    q = _softplus(q)                                        # [Cout, T], f32

    # one matmul yields denom (row 0, from the ones rows) and numer (rows 8..)
    combined = jnp.dot(sz_ref[0].astype(compute_dtype), q.astype(compute_dtype),
                       preferred_element_type=jnp.float32)  # [Cp+8, T]

    cout = out_ref.shape[1]
    denom = combined[0:1]                                   # [1, T]
    inv = pl.reciprocal(jnp.maximum(denom, eps), approx=approx_recip)
    out_ref[0] = (combined[8:8 + cout] * inv).astype(out_ref.dtype)


# --------------------------------------------------------------------------
# One-time weight prep (fuse / pad / cast) -- hoisted out of the forward
# --------------------------------------------------------------------------
def prepare_params(params, compute_dtype=jnp.bfloat16):
    cout, cin = params["wk1"].shape
    cp = _round_up(cout, 8)                    # sublane-aligned channel padding

    def pad_rows(w, rows):
        return jnp.pad(w, ((0, rows - w.shape[0]), (0, 0)))

    def pad_cols(w, cols):
        return jnp.pad(w, ((0, 0), (0, cols - w.shape[1])))

    # Fused source-path first layer: [key1 | ones | value].  The 8 "ones" rows
    # (weight 0, bias 1 -> ReLU -> 1) turn Z = sum_hw(key) into extra rows of
    # the S matmul, removing the XLU lane reduction.
    wkv1 = jnp.concatenate([pad_rows(params["wk1"], cp),
                            jnp.zeros((8, cin), jnp.float32),
                            pad_rows(params["wv"], cp)], axis=0)
    bkv1 = jnp.concatenate([pad_rows(params["bk1"], cp),
                            jnp.ones((8, 1), jnp.float32),
                            pad_rows(params["bv"], cp)], axis=0)

    return dict(
        wkv1=wkv1.astype(compute_dtype),                        # [2*Cp+8, Cin]
        bkv1=bkv1.astype(jnp.float32),                          # [2*Cp+8, 1]
        wk2=pad_cols(params["wk2"], cp).astype(compute_dtype),  # [Cout, Cp]
        bk2=params["bk2"].astype(jnp.float32),                  # [Cout, 1]
        wq1=pad_rows(params["wq1"], cp).astype(compute_dtype),  # [Cp, Cin]
        bq1=pad_rows(params["bq1"], cp).astype(jnp.float32),    # [Cp, 1]
        wq2=pad_cols(params["wq2"], cp).astype(compute_dtype),  # [Cout, Cp]
        bq2=params["bq2"].astype(jnp.float32),                  # [Cout, 1]
    )


# --------------------------------------------------------------------------
# Wrapper
# --------------------------------------------------------------------------
def global_context_attention(target_nchw, source_nchw, prepared_params, *,
                             eps=1e-12, max_hw_tile=2048, out_dtype=None,
                             vmem_budget_bytes=36 << 20, input_buffering=None):
    p = prepared_params
    B, Cin, H, W = target_nchw.shape
    HW = H * W
    cout, cp = p["wk2"].shape                  # [Cout, Cp]
    R = cp + 8                                 # ones rows + value rows
    compute_dtype = p["wkv1"].dtype
    if out_dtype is None:
        out_dtype = target_nchw.dtype
    act_bytes = np.dtype(compute_dtype).itemsize
    out_bytes = np.dtype(out_dtype).itemsize
    approx_recip = bool(np.dtype(compute_dtype) != np.dtype(np.float32))

    T, HWp, per_lane = _pick_hw_tile(HW, Cin, cout, cp, act_bytes, out_bytes,
                                     max_hw_tile, vmem_budget_bytes)
    nT = HWp // T
    vmem_limit = int(min(48 << 20, max(32 << 20, 2 * per_lane * T + (8 << 20))))

    # Free reshape NCHW -> [B, C, HW] (channels on sublanes, HW on lanes);
    # cast activations once for the MXU / reduced HBM traffic.
    tgt = target_nchw.reshape(B, Cin, HW).astype(compute_dtype)
    src = source_nchw.reshape(B, Cin, HW).astype(compute_dtype)
    if HWp != HW:                              # pad HW to a tile multiple
        tgt = jnp.pad(tgt, ((0, 0), (0, 0), (0, HWp - HW)))
        src = jnp.pad(src, ((0, 0), (0, 0), (0, HWp - HW)))

    # --- pass 1: fused S / Z reduction over source HW tiles ----------------
    # Split the HW reduction across the two v7x TensorCores when there is no
    # batch parallelism (no-op cost on 1-TC v5e/v6e beyond a tiny partial sum).
    nsplit = 2 if (B == 1 and nT >= 2 and nT % 2 == 0) else 1
    nTi = nT // nsplit

    src_spec = pl.BlockSpec((1, Cin, T), lambda s, b, t: (b, 0, s * nTi + t))
    sz_part_spec = pl.BlockSpec((1, R, cout), lambda s, b, t: (s * B + b, 0, 0))

    def w_spec1(shape):
        return pl.BlockSpec(shape, lambda s, b, t: (0, 0))

    ctx_cost = pl.CostEstimate(
        flops=int(2 * B * HWp * ((2 * cp + 8) * Cin + cout * cp + (cp + 8) * cout)),
        transcendentals=int(2 * B * HWp * cout),
        bytes_accessed=int(B * HWp * Cin * act_bytes + nsplit * B * R * cout * 4
                           + ((2 * cp + 8) * (Cin + 1) + cout * (cp + 1)) * 4))

    sz_partial = pl.pallas_call(
        functools.partial(_context_kernel, cp=cp, hw=HW, tile=T,
                          compute_dtype=compute_dtype),
        out_shape=jax.ShapeDtypeStruct((nsplit * B, R, cout), jnp.float32),
        grid=(nsplit, B, nTi),
        in_specs=[src_spec,
                  w_spec1((2 * cp + 8, Cin)), w_spec1((2 * cp + 8, 1)),
                  w_spec1((cout, cp)), w_spec1((cout, 1))],
        out_specs=sz_part_spec,
        compiler_params=pltpu.CompilerParams(
            dimension_semantics=("parallel", "parallel", "arbitrary"),
            vmem_limit_bytes=vmem_limit),
        cost_estimate=ctx_cost,
    )(src, p["wkv1"], p["bkv1"], p["wk2"], p["bk2"])

    SZ = (sz_partial if nsplit == 1
          else sz_partial.reshape(nsplit, B, R, cout).sum(axis=0))

    # --- pass 2: query projection + apply global context -------------------
    if input_buffering is None:
        tgt_spec = pl.BlockSpec((1, Cin, T), lambda b, t: (b, 0, t))
    else:  # e.g. 3 on v5e if xprof shows exposed DMA on this pass
        tgt_spec = pl.BlockSpec((1, Cin, T), lambda b, t: (b, 0, t),
                                pipeline_mode=pl.Buffered(input_buffering))

    def w_spec2(shape):
        return pl.BlockSpec(shape, lambda b, t: (0, 0))

    apply_cost = pl.CostEstimate(
        flops=int(2 * B * HWp * (cp * Cin + cout * cp + (cp + 8) * cout + cout)),
        transcendentals=int(B * HWp * (2 * cout + 1)),
        bytes_accessed=int(B * HWp * Cin * act_bytes + B * HWp * cout * out_bytes
                           + B * R * cout * 4
                           + (cp * (Cin + 1) + cout * (cp + 1)) * 4))

    out = pl.pallas_call(
        functools.partial(_apply_kernel, eps=eps, compute_dtype=compute_dtype,
                          approx_recip=approx_recip),
        out_shape=jax.ShapeDtypeStruct((B, cout, HWp), out_dtype),
        grid=(B, nT),
        in_specs=[tgt_spec,
                  w_spec2((cp, Cin)), w_spec2((cp, 1)),
                  w_spec2((cout, cp)), w_spec2((cout, 1)),
                  pl.BlockSpec((1, R, cout), lambda b, t: (b, 0, 0))],
        out_specs=pl.BlockSpec((1, cout, T), lambda b, t: (b, 0, t)),
        compiler_params=pltpu.CompilerParams(
            dimension_semantics=("parallel", "parallel"),
            vmem_limit_bytes=vmem_limit),
        cost_estimate=apply_cost,
    )(tgt, p["wq1"], p["bq1"], p["wq2"], p["bq2"], SZ)

    if HWp != HW:
        out = out[:, :, :HW]
    return out.reshape(B, cout, H, W)


# --------------------------------------------------------------------------
# Parameters (xavier-uniform conv weights, default-init eval-mode BN folded in)
# --------------------------------------------------------------------------
def init_params(key, in_channels, out_channels, bn_eps=1e-5):
    def xavier(k, fan_in, fan_out):
        bound = float(np.sqrt(6.0 / (fan_in + fan_out)))
        # PyTorch conv weight layout [Cout, Cin, 1, 1] -> keep [Cout, Cin]
        return jax.random.uniform(k, (fan_out, fan_in), jnp.float32, -bound, bound)

    def fold_bn(w_oi, gamma, beta, mean, var):
        # 1x1 conv (bias=False, followed by norm) + eval-mode BatchNorm2d folded
        # into y = W x + b with W in [Cout, Cin], b in [Cout, 1].
        scale = gamma / jnp.sqrt(var + bn_eps)
        w_folded = w_oi * scale[:, None]                  # [Cout, Cin]
        b_folded = (beta - mean * scale).reshape(-1, 1)   # [Cout, 1]
        return w_folded, b_folded

    keys = jax.random.split(key, 5)
    ones = jnp.ones((out_channels,), jnp.float32)
    zeros = jnp.zeros((out_channels,), jnp.float32)

    wq1, bq1 = fold_bn(xavier(keys[0], in_channels, out_channels), ones, zeros, zeros, ones)
    wq2, bq2 = fold_bn(xavier(keys[1], out_channels, out_channels), ones, zeros, zeros, ones)
    wk1, bk1 = fold_bn(xavier(keys[2], in_channels, out_channels), ones, zeros, zeros, ones)
    wk2, bk2 = fold_bn(xavier(keys[3], out_channels, out_channels), ones, zeros, zeros, ones)
    wv, bv = fold_bn(xavier(keys[4], in_channels, out_channels), ones, zeros, zeros, ones)

    return dict(wq1=wq1, bq1=bq1, wq2=wq2, bq2=bq2,
                wk1=wk1, bk1=bk1, wk2=wk2, bk2=bk2, wv=wv, bv=bv)


# --------------------------------------------------------------------------
# Pure-JAX reference mirroring the PyTorch forward (eval-mode BN)
# --------------------------------------------------------------------------
def _reference(target, source, p, eps=1e-12):
    B, Cin, H, W = target.shape
    HW = H * W
    t = target.reshape(B, Cin, HW)
    s = source.reshape(B, Cin, HW)

    def proj2(x, w1, b1, w2, b2):
        h = jnp.maximum(jnp.einsum("oc,bcn->bon", w1, x) + b1[None], 0.0)
        return _softplus(jnp.einsum("od,bdn->bon", w2, h) + b2[None])

    q = proj2(t, p["wq1"], p["bq1"], p["wq2"], p["bq2"])          # [B,Cout,HW]
    k = proj2(s, p["wk1"], p["bk1"], p["wk2"], p["bk2"])          # [B,Cout,HW]
    v = jnp.maximum(jnp.einsum("oc,bcn->bon", p["wv"], s) + p["bv"][None], 0.0)

    S = jnp.einsum("bcn,bdn->bcd", v, k)                          # value @ key^T
    Z = jnp.sum(k, axis=2)                                        # [B,Cout]
    denom = jnp.einsum("bc,bcn->bn", Z, q)                        # [B,HW]
    numer = jnp.einsum("bcd,bdn->bcn", S, q)                      # [B,Cout,HW]
    out = numer / jnp.maximum(denom, eps)[:, None, :]
    return out.reshape(B, -1, H, W)


if __name__ == "__main__":
    key = jax.random.PRNGKey(0)
    k_t, k_s, k_p = jax.random.split(key, 3)

    B, Cin, Cout, H, W = 2, 4, 8, 16, 16
    target = jax.random.normal(k_t, (B, Cin, H, W), jnp.float32)
    source = jax.random.normal(k_s, (B, Cin, H, W), jnp.float32)
    params = init_params(k_p, Cin, Cout)
    ref = _reference(target, source, params)

    # f32 compute path: tight algorithmic check (exact reciprocal, no dtype loss).
    p_f32 = prepare_params(params, compute_dtype=jnp.float32)
    out_f32 = jax.block_until_ready(global_context_attention(target, source, p_f32))
    np.testing.assert_allclose(np.asarray(out_f32), np.asarray(ref),
                               rtol=1e-4, atol=1e-4)

    # bf16 compute path (production default): halved HBM traffic, native MXU
    # rate, approx EUP reciprocal -> bf16-level tolerance.
    p_bf16 = prepare_params(params)          # compute_dtype=jnp.bfloat16
    out_bf16 = jax.block_until_ready(global_context_attention(target, source, p_bf16))
    np.testing.assert_allclose(np.asarray(out_bf16), np.asarray(ref),
                               rtol=5e-2, atol=5e-2)

    print("KERNEL_OK")
</pallas_src>

<mosaic_0001>
module attributes {stable_mosaic.version = 11 : i64} {
  func.func @_context_kernel(%arg0: i32, %arg1: i32, %arg2: i32, %arg3: memref<1x4x256xf32, #tpu.memory_space<vmem>>, %arg4: memref<24x4xf32, #tpu.memory_space<vmem>>, %arg5: memref<24x1xf32, #tpu.memory_space<vmem>>, %arg6: memref<8x8xf32, #tpu.memory_space<vmem>>, %arg7: memref<8x1xf32, #tpu.memory_space<vmem>>, %arg8: memref<1x16x8xf32, #tpu.memory_space<vmem>>) attributes {dimension_semantics = [#tpu.dimension_semantics<parallel>, #tpu.dimension_semantics<parallel>, #tpu.dimension_semantics<arbitrary>], iteration_bounds = array<i64: 1, 2, 1>, scalar_prefetch = 0 : i64, scratch_operands = 0 : i64, tpu.core_type = #tpu.core_type<tc>, window_params = [{transform_indices = @transform_0, window_bounds = array<i64: 1, 4, 256>}, {pipeline_mode = #tpu.pipeline_mode<synchronous>, transform_indices = @transform_1, window_bounds = array<i64: 24, 4>}, {pipeline_mode = #tpu.pipeline_mode<synchronous>, transform_indices = @transform_2, window_bounds = array<i64: 24, 1>}, {pipeline_mode = #tpu.pipeline_mode<synchronous>, transform_indices = @transform_3, window_bounds = array<i64: 8, 8>}, {pipeline_mode = #tpu.pipeline_mode<synchronous>, transform_indices = @transform_4, window_bounds = array<i64: 8, 1>}, {transform_indices = @transform_5, window_bounds = array<i64: 1, 16, 8>}]} {
    %c0_i32 = arith.constant 0 : i32
    %0 = arith.cmpi eq, %arg2, %c0_i32 : i32
    %1 = arith.extui %0 : i1 to i32
    %c0_i32_0 = arith.constant 0 : i32
    %2 = arith.cmpi ne, %1, %c0_i32_0 : i32
    scf.if %2 {
      %cst_22 = arith.constant 0.000000e+00 : f32
      %33 = vector.broadcast %cst_22 : f32 to vector<16x8xf32>
      %c0_23 = arith.constant 0 : index
      %c0_24 = arith.constant 0 : index
      %c0_25 = arith.constant 0 : index
      %34 = vector.load %arg8[%c0_23, %c0_24, %c0_25] : memref<1x16x8xf32, #tpu.memory_space<vmem>>, vector<1x16x8xf32>
      %35 = vector.shape_cast %34 : vector<1x16x8xf32> to vector<16x8xf32>
      %36 = vector.shape_cast %33 : vector<16x8xf32> to vector<1x16x8xf32>
      tpu.vector_store %arg8[%c0_23, %c0_24, %c0_25], %36 {strides = array<i32>} : memref<1x16x8xf32, #tpu.memory_space<vmem>>, vector<1x16x8xf32>,
    } else {
    }
    %c0 = arith.constant 0 : index
    %c0_1 = arith.constant 0 : index
    %c0_2 = arith.constant 0 : index
    %3 = vector.load %arg3[%c0, %c0_1, %c0_2] : memref<1x4x256xf32, #tpu.memory_space<vmem>>, vector<1x4x256xf32>
    %4 = vector.shape_cast %3 : vector<1x4x256xf32> to vector<4x256xf32>
    %c0_3 = arith.constant 0 : index
    %c0_4 = arith.constant 0 : index
    %5 = vector.load %arg4[%c0_3, %c0_4] : memref<24x4xf32, #tpu.memory_space<vmem>>, vector<24x4xf32>
    %cst = arith.constant dense<0.000000e+00> : vector<24x256xf32>
    %6 = tpu.matmul %5, %4, %cst {dimension_numbers = #tpu.dot_dimension_numbers<[1], [0], [0], [1], [0, 0, 1, 1], [], []>} : vector<24x4xf32>, vector<4x256xf32>, vector<24x256xf32> -> vector<24x256xf32>
    %c0_5 = arith.constant 0 : index
    %c0_6 = arith.constant 0 : index
    %7 = vector.load %arg5[%c0_5, %c0_6] : memref<24x1xf32, #tpu.memory_space<vmem>>, vector<24x1xf32>
    %8 = vector.broadcast %7 : vector<24x1xf32> to vector<24x256xf32>
    %9 = arith.addf %6, %8 : vector<24x256xf32>
    %cst_7 = arith.constant 0.000000e+00 : f32
    %10 = vector.broadcast %cst_7 : f32 to vector<24x256xf32>
    %11 = arith.maximumf %9, %10 : vector<24x256xf32>
    %12 = vector.extract_strided_slice %11 {offsets = [0, 0], sizes = [8, 256], strides = [1, 1]} : vector<24x256xf32> to vector<8x256xf32>
    %13 = vector.extract_strided_slice %11 {offsets = [8, 0], sizes = [16, 256], strides = [1, 1]} : vector<24x256xf32> to vector<16x256xf32>
    %c0_8 = arith.constant 0 : index
    %c0_9 = arith.constant 0 : index
    %14 = vector.load %arg6[%c0_8, %c0_9] : memref<8x8xf32, #tpu.memory_space<vmem>>, vector<8x8xf32>
    %cst_10 = arith.constant dense<0.000000e+00> : vector<8x256xf32>
    %15 = tpu.matmul %14, %12, %cst_10 {dimension_numbers = #tpu.dot_dimension_numbers<[1], [0], [0], [1], [0, 0, 1, 1], [], []>} : vector<8x8xf32>, vector<8x256xf32>, vector<8x256xf32> -> vector<8x256xf32>
    %c0_11 = arith.constant 0 : index
    %c0_12 = arith.constant 0 : index
    %16 = vector.load %arg7[%c0_11, %c0_12] : memref<8x1xf32, #tpu.memory_space<vmem>>, vector<8x1xf32>
    %17 = vector.broadcast %16 : vector<8x1xf32> to vector<8x256xf32>
    %18 = arith.addf %15, %17 : vector<8x256xf32>
    %cst_13 = arith.constant 2.000000e+01 : f32
    %19 = vector.broadcast %cst_13 : f32 to vector<8x256xf32>
    %20 = arith.cmpf ogt, %18, %19 : vector<8x256xf32>
    %cst_14 = arith.constant 2.000000e+01 : f32
    %21 = vector.broadcast %cst_14 : f32 to vector<8x256xf32>
    %22 = arith.minimumf %18, %21 : vector<8x256xf32>
    %23 = math.exp %22 : vector<8x256xf32>
    %24 = math.log1p %23 : vector<8x256xf32>
    %25 = arith.select %20, %18, %24 : vector<8x256xi1>, vector<8x256xf32>
    %c0_15 = arith.constant 0 : index
    %c0_16 = arith.constant 0 : index
    %c0_17 = arith.constant 0 : index
    %26 = vector.load %arg8[%c0_15, %c0_16, %c0_17] : memref<1x16x8xf32, #tpu.memory_space<vmem>>, vector<1x16x8xf32>
    %27 = vector.shape_cast %26 : vector<1x16x8xf32> to vector<16x8xf32>
    %cst_18 = arith.constant dense<0.000000e+00> : vector<16x8xf32>
    %28 = tpu.matmul %13, %25, %cst_18 {dimension_numbers = #tpu.dot_dimension_numbers<[1], [1], [0], [0], [0, 0, 1, 0], [], []>} : vector<16x256xf32>, vector<8x256xf32>, vector<16x8xf32> -> vector<16x8xf32>
    %29 = arith.addf %27, %28 : vector<16x8xf32>
    %c0_19 = arith.constant 0 : index
    %c0_20 = arith.constant 0 : index
    %c0_21 = arith.constant 0 : index
    %30 = vector.load %arg8[%c0_19, %c0_20, %c0_21] : memref<1x16x8xf32, #tpu.memory_space<vmem>>, vector<1x16x8xf32>
    %31 = vector.shape_cast %30 : vector<1x16x8xf32> to vector<16x8xf32>
    %32 = vector.shape_cast %29 : vector<16x8xf32> to vector<1x16x8xf32>
    tpu.vector_store %arg8[%c0_19, %c0_20, %c0_21], %32 {strides = array<i32>} : memref<1x16x8xf32, #tpu.memory_space<vmem>>, vector<1x16x8xf32>,
    return
  }
  func.func @transform_0(%arg0: i32, %arg1: i32, %arg2: i32) -> (i32, i32, i32) {
    %c1_i32 = arith.constant 1 : i32
    %0 = arith.muli %arg0, %c1_i32 : i32
    %1 = arith.addi %0, %arg2 : i32
    %c0_i32 = arith.constant 0 : i32
    %c0_i32_0 = arith.constant 0 : i32
    return %arg1, %c0_i32, %1 : i32, i32, i32
  }
  func.func @transform_1(%arg0: i32, %arg1: i32, %arg2: i32) -> (i32, i32) {
    %c0_i32 = arith.constant 0 : i32
    %c0_i32_0 = arith.constant 0 : i32
    %c0_i32_1 = arith.constant 0 : i32
    return %c0_i32, %c0_i32_0 : i32, i32
  }
  func.func @transform_2(%arg0: i32, %arg1: i32, %arg2: i32) -> (i32, i32) {
    %c0_i32 = arith.constant 0 : i32
    %c0_i32_0 = arith.constant 0 : i32
    %c0_i32_1 = arith.constant 0 : i32
    return %c0_i32, %c0_i32_0 : i32, i32
  }
  func.func @transform_3(%arg0: i32, %arg1: i32, %arg2: i32) -> (i32, i32) {
    %c0_i32 = arith.constant 0 : i32
    %c0_i32_0 = arith.constant 0 : i32
    %c0_i32_1 = arith.constant 0 : i32
    return %c0_i32, %c0_i32_0 : i32, i32
  }
  func.func @transform_4(%arg0: i32, %arg1: i32, %arg2: i32) -> (i32, i32) {
    %c0_i32 = arith.constant 0 : i32
    %c0_i32_0 = arith.constant 0 : i32
    %c0_i32_1 = arith.constant 0 : i32
    return %c0_i32, %c0_i32_0 : i32, i32
  }
  func.func @transform_5(%arg0: i32, %arg1: i32, %arg2: i32) -> (i32, i32, i32) {
    %c2_i32 = arith.constant 2 : i32
    %0 = arith.muli %arg0, %c2_i32 : i32
    %1 = arith.addi %0, %arg1 : i32
    %c0_i32 = arith.constant 0 : i32
    %c0_i32_0 = arith.constant 0 : i32
    %c0_i32_1 = arith.constant 0 : i32
    return %1, %c0_i32, %c0_i32_0 : i32, i32, i32
  }
}

</mosaic_0001>

<llo_original>
// kernel: tpu_custom_call.1
$region0: #{tpu_custom_call.1}
  #allocation0 [shape = 'u32[]', space=smem, size = 0x4, offset = 0x4, fixed_abs, tag = 'smem constant byte address 0x4 - core index']
  #allocation1 [shape = 'u32[144,128]{1,0:T(1,128)}', space=vmem, size = 0x12000, scoped, tag = 'internal scratch']
  %s0 = inlined_call_operand.vmem [shape: f32[2,4,256], index: 0, kind: input, shape index: {}]
  %s1 = inlined_call_operand.vmem [shape: f32[24,4], index: 1, kind: input, shape index: {}]
  %s2 = inlined_call_operand.vmem [shape: f32[24,1], index: 2, kind: input, shape index: {}]
  %s3 = inlined_call_operand.vmem [shape: f32[8,8], index: 3, kind: input, shape index: {}]
  %s4 = inlined_call_operand.vmem [shape: f32[8,1], index: 4, kind: input, shape index: {}]
  %s5 = inlined_call_operand.vmem [shape: f32[2,16,8], index: 5, kind: output, shape index: {}]
  %s6 = sld [smem:[#allocation0]]
  $region57: #{tpu_custom_call.1} parent=0
    _
  %s8 = ssub.s32 1, %s6
  %s9 = scalar_select 0, %s8, %s6
  loop: start=0, step=1, limit=4
  $region2: #{tpu_custom_call.1} parent=0 // loop_pre_header
    _
  $region3: #{tpu_custom_call.1} parent=0 // loop_header
    %s11 = sphi 0, %s15
    %p12 = scmp.ge.s32.totalorder %s11, 4
    %s18 = sphi 0, %s37
    %s19 = sphi 0, %s33
    %s20 = sphi 0, %s29
    %s21 = sphi 0, %s18
    %s22 = sphi 0, %s19
    %s23 = sphi 0, %s20
    %s24 = sphi 0, %s21
    %s25 = sphi 0, %s22
    %s26 = sphi 0, %s23
    %s44 = sphi 0, %s46
    %s47 = sphi 0, %s44
    %s48 = sphi 0, %s47
    %s64 = sphi 0, %s48
    %s68 = sphi 0, %s68
    %s70 = sphi 0, %s68
    %s71 = sphi 0, %s70
    %s85 = sphi 0, %s71
    %s89 = sphi 0, %s89
    %s91 = sphi 0, %s89
    %s92 = sphi 0, %s91
    %s106 = sphi 0, %s92
    %s110 = sphi 0, %s110
    %s112 = sphi 0, %s110
    %s113 = sphi 0, %s112
    %s127 = sphi 0, %s113
    %s131 = sphi 0, %s131
    %s133 = sphi 0, %s131
    %s134 = sphi 0, %s133
    %s148 = sphi 0, %s134
    %s158 = sphi 0, %s160
    %s161 = sphi 0, %s158
    %s162 = sphi 0, %s161
    %s178 = sphi 0, %s162
  $region4: #{tpu_custom_call.1} parent=0 // loop_header_branch
    %14 = sbr.rel (%p12) target = $region8
  $region5: #{tpu_custom_call.1} parent=0 // loop_body
    %s16 = ssub.s32 %s11, 1
    %s17 = ssub.s32 %s11, 2
    %s27 = sadd.s32 1, %s20
    %p28 = scmp.ge.s32.totalorder %s27, 1
    %s29 = scalar_select %p28, 0, %s27
    %s30 = sadd.s32 1, %s19
    %s31 = scalar_select %p28, %s30, %s19
    %p32 = scmp.ge.s32.totalorder %s31, 2
    %s33 = scalar_select %p32, 0, %s31
    %s34 = sadd.s32 1, %s18
    %s35 = scalar_select %p32, %s34, %s18
    %p36 = scmp.ge.s32.totalorder %s35, 1
    %s37 = scalar_select %p36, 0, %s35
    %s38 = sadd.s32 %s18, %s20
    %s39 = sadd.s32 %s37, %s29
    %s40 = ssub.s32 %s19, %s33
    %s41 = ssub.s32 %s38, %s39
    %s42 = sor.u32 %s40, %s41
    %p43 = scmp.eq.s32.totalorder %s42, 0
    %s45 = sadd.s32 %s44, 1
    %s46 = scalar_select %p43, %s44, %s45
    %p49 = pneg %p43
    %p50 = scmp.eq.s32.totalorder %s11, 1
    %p51 = por %p49, %p50
    %p52 = scmp.ne.s32.totalorder %s44, %s47
    %p53 = scmp.eq.s32.totalorder %s11, 0
    %p54 = por %p52, %p53
    %p55 = scmp.ne.s32.totalorder %s44, %s47
    %p56 = scmp.eq.s32.totalorder %s16, 1
    %p57 = por %p55, %p56
    %p58 = scmp.ne.s32.totalorder %s47, %s48
    %p59 = scmp.eq.s32.totalorder %s16, 0
    %p60 = por %p58, %p59
    %p61 = scmp.ne.s32.totalorder %s47, %s48
    %p62 = scmp.eq.s32.totalorder %s17, 1
    %p63 = por %p61, %p62
    %p65 = scmp.ne.s32.totalorder %s48, %s64
    %p66 = scmp.eq.s32.totalorder %s17, 0
    %p67 = por %p65, %p66
    %s69 = sadd.s32 %s68, 1
    %p72 = scmp.eq.s32.totalorder %s11, 1
    %p73 = scmp.ne.s32.totalorder %s68, %s70
    %p74 = scmp.eq.s32.totalorder %s11, 0
    %p75 = por %p73, %p74
    %p76 = scmp.ne.s32.totalorder %s68, %s70
    %p77 = scmp.eq.s32.totalorder %s16, 1
    %p78 = por %p76, %p77
    %p79 = scmp.ne.s32.totalorder %s70, %s71
    %p80 = scmp.eq.s32.totalorder %s16, 0
    %p81 = por %p79, %p80
    %p82 = scmp.ne.s32.totalorder %s70, %s71
    %p83 = scmp.eq.s32.totalorder %s17, 1
    %p84 = por %p82, %p83
    %p86 = scmp.ne.s32.totalorder %s71, %s85
    %p87 = scmp.eq.s32.totalorder %s17, 0
    %p88 = por %p86, %p87
    %s90 = sadd.s32 %s89, 1
    %p93 = scmp.eq.s32.totalorder %s11, 1
    %p94 = scmp.ne.s32.totalorder %s89, %s91
    %p95 = scmp.eq.s32.totalorder %s11, 0
    %p96 = por %p94, %p95
    %p97 = scmp.ne.s32.totalorder %s89, %s91
    %p98 = scmp.eq.s32.totalorder %s16, 1
    %p99 = por %p97, %p98
    %p100 = scmp.ne.s32.totalorder %s91, %s92
    %p101 = scmp.eq.s32.totalorder %s16, 0
    %p102 = por %p100, %p101
    %p103 = scmp.ne.s32.totalorder %s91, %s92
    %p104 = scmp.eq.s32.totalorder %s17, 1
    %p105 = por %p103, %p104
    %p107 = scmp.ne.s32.totalorder %s92, %s106
    %p108 = scmp.eq.s32.totalorder %s17, 0
    %p109 = por %p107, %p108
    %s111 = sadd.s32 %s110, 1
    %p114 = scmp.eq.s32.totalorder %s11, 1
    %p115 = scmp.ne.s32.totalorder %s110, %s112
    %p116 = scmp.eq.s32.totalorder %s11, 0
    %p117 = por %p115, %p116
    %p118 = scmp.ne.s32.totalorder %s110, %s112
    %p119 = scmp.eq.s32.totalorder %s16, 1
    %p120 = por %p118, %p119
    %p121 = scmp.ne.s32.totalorder %s112, %s113
    %p122 = scmp.eq.s32.totalorder %s16, 0
    %p123 = por %p121, %p122
    %p124 = scmp.ne.s32.totalorder %s112, %s113
    %p125 = scmp.eq.s32.totalorder %s17, 1
    %p126 = por %p124, %p125
    %p128 = scmp.ne.s32.totalorder %s113, %s127
    %p129 = scmp.eq.s32.totalorder %s17, 0
    %p130 = por %p128, %p129
    %s132 = sadd.s32 %s131, 1
    %p135 = scmp.eq.s32.totalorder %s11, 1
    %p136 = scmp.ne.s32.totalorder %s131, %s133
    %p137 = scmp.eq.s32.totalorder %s11, 0
    %p138 = por %p136, %p137
    %p139 = scmp.ne.s32.totalorder %s131, %s133
    %p140 = scmp.eq.s32.totalorder %s16, 1
    %p141 = por %p139, %p140
    %p142 = scmp.ne.s32.totalorder %s133, %s134
    %p143 = scmp.eq.s32.totalorder %s16, 0
    %p144 = por %p142, %p143
    %p145 = scmp.ne.s32.totalorder %s133, %s134
    %p146 = scmp.eq.s32.totalorder %s17, 1
    %p147 = por %p145, %p146
    %p149 = scmp.ne.s32.totalorder %s134, %s148
    %p150 = scmp.eq.s32.totalorder %s17, 0
    %p151 = por %p149, %p150
    %s152 = smul.u32 %s18, 2
    %s153 = sadd.s32 %s152, %s19
    %s154 = smul.u32 %s37, 2
    %s155 = sadd.s32 %s154, %s33
    %s156 = ssub.s32 %s153, %s155
    %p157 = scmp.eq.s32.totalorder %s156, 0
    %s159 = sadd.s32 %s158, 1
    %s160 = scalar_select %p157, %s158, %s159
    %p163 = pneg %p157
    %p164 = scmp.eq.s32.totalorder %s11, 1
    %p165 = por %p163, %p164
    %p166 = scmp.ne.s32.totalorder %s158, %s161
    %p167 = scmp.eq.s32.totalorder %s11, 0
    %p168 = por %p166, %p167
    %p169 = scmp.ne.s32.totalorder %s158, %s161
    %p170 = scmp.eq.s32.totalorder %s16, 1
    %p171 = por %p169, %p170
    %p172 = scmp.ne.s32.totalorder %s161, %s162
    %p173 = scmp.eq.s32.totalorder %s16, 0
    %p174 = por %p172, %p173
    %p175 = scmp.ne.s32.totalorder %s161, %s162
    %p176 = scmp.eq.s32.totalorder %s17, 1
    %p177 = por %p175, %p176
    %p179 = scmp.ne.s32.totalorder %s162, %s178
    %p180 = scmp.eq.s32.totalorder %s17, 0
    %p181 = por %p179, %p180
    %p182 = scmp.le.s32.totalorder 1, %s11
    %p183 = scmp.lt.s32.totalorder %s11, 3
    %p184 = pnand %p182, %p183
    %p185 = pneg %p184
    // Predicated region
    $region9: #{tpu_custom_call.1} parent=5 // pred_check
      _
    $region10: #{tpu_custom_call.1} parent=5 // pred_check_branch
      %187 = sbr.rel (%p184) target = $region12
    $region11: #{tpu_custom_call.1} parent=5 // pred_region
      %s188 = ssub.s32 %s11, 1
      // Predicated region
      $region13: #{tpu_custom_call.1} parent=11 // pred_check
        %p189 = pneg %p81
      $region14: #{tpu_custom_call.1} parent=11 // pred_check_branch
        %191 = sbr.rel (%p189) target = $region16
      $region15: #{tpu_custom_call.1} parent=11 // pred_region
        _
      $region16: #{tpu_custom_call.1} parent=11 // pred_fallthru
        _
      // Predicated region
      $region17: #{tpu_custom_call.1} parent=11 // pred_check
        %p192 = pneg %p102
      $region18: #{tpu_custom_call.1} parent=11 // pred_check_branch
        %194 = sbr.rel (%p192) target = $region20
      $region19: #{tpu_custom_call.1} parent=11 // pred_region
        _
      $region20: #{tpu_custom_call.1} parent=11 // pred_fallthru
        _
      // Predicated region
      $region21: #{tpu_custom_call.1} parent=11 // pred_check
        %p195 = pneg %p123
      $region22: #{tpu_custom_call.1} parent=11 // pred_check_branch
        %197 = sbr.rel (%p195) target = $region24
      $region23: #{tpu_custom_call.1} parent=11 // pred_region
        _
      $region24: #{tpu_custom_call.1} parent=11 // pred_fallthru
        _
      // Predicated region
      $region25: #{tpu_custom_call.1} parent=11 // pred_check
        %p198 = pneg %p144
      $region26: #{tpu_custom_call.1} parent=11 // pred_check_branch
        %200 = sbr.rel (%p198) target = $region28
      $region27: #{tpu_custom_call.1} parent=11 // pred_region
        _
      $region28: #{tpu_custom_call.1} parent=11 // pred_fallthru
        _
    $region12: #{tpu_custom_call.1} parent=5 // pred_fallthru
      _
    %p201 = scmp.lt.s32.totalorder %s11, 2
    // Predicated region
    $region29: #{tpu_custom_call.1} parent=5 // pred_check
      %p202 = pneg %p201
    $region30: #{tpu_custom_call.1} parent=5 // pred_check_branch
      %204 = sbr.rel (%p202) target = $region32
    $region31: #{tpu_custom_call.1} parent=5 // pred_region
      // Predicated region
      $region33: #{tpu_custom_call.1} parent=31 // pred_check
        %p205 = pneg %p54
      $region34: #{tpu_custom_call.1} parent=31 // pred_check_branch
        %207 = sbr.rel (%p205) target = $region36
      $region35: #{tpu_custom_call.1} parent=31 // pred_region
        %s208 = sadd.s32 %s18, %s20
        %s209 = smul.u32 2, %s208
        %p210 = scmp.lt.s32.totalorder %s19, 1
        %s211 = scalar_select %p210, %s19, 1
        %p212 = scmp.lt.s32.totalorder %s209, 1
        %s213 = scalar_select %p212, %s209, 1
        %s214 = smul.addr %s211, 2
        %s215 = sadd.s32 %s213, %s214
        %s216 = smul.addr %s215, 4
        %s217 = scalar_lea.vmem %s0, %s216
        %s218 = sadd.s32 %s18, %s20
        %s219 = smul.u32 2, %s218
      $region36: #{tpu_custom_call.1} parent=31 // pred_fallthru
        _
    $region32: #{tpu_custom_call.1} parent=5 // pred_fallthru
      _
    %p220 = scmp.le.s32.totalorder 1, %s11
    %p221 = scmp.lt.s32.totalorder %s11, 3
    %p222 = pnand %p220, %p221
    %p223 = pneg %p222
    // Predicated region
    $region37: #{tpu_custom_call.1} parent=5 // pred_check
      _
    $region38: #{tpu_custom_call.1} parent=5 // pred_check_branch
      %225 = sbr.rel (%p222) target = $region40
    $region39: #{tpu_custom_call.1} parent=5 // pred_region
      %s226 = ssub.s32 %s11, 1
      %s227 = sadd.s32 %s21, %s23
      %s228 = smul.u32 2, %s227
      %p229 = scmp.lt.s32.totalorder %s22, 1
      %s230 = scalar_select %p229, %s22, 1
      %p231 = scmp.lt.s32.totalorder %s228, 1
      %s232 = scalar_select %p231, %s228, 1
      %s233 = smul.addr %s230, 2
      %s234 = sadd.s32 %s232, %s233
      %s235 = smul.addr %s234, 4
      %s236 = scalar_lea.vmem %s0, %s235
      %p237 = pneg %p60
      %p238 = pneg %p57
      %p239 = pneg %p81
      %p240 = pneg %p78
      %p241 = pneg %p102
      %p242 = pneg %p99
      %p243 = pneg %p123
      %p244 = pneg %p120
      %p245 = pneg %p144
      %p246 = pneg %p141
      %p247 = pneg %p174
      %p248 = pneg %p171
      %s249 = smul.u32 %s21, 2
      %s250 = sadd.s32 %s249, %s22
      %p251 = scmp.lt.s32.totalorder %s250, 1
      %s252 = scalar_select %p251, %s250, 1
      %s253 = smul.addr %s252, 2
      %s254 = smul.addr %s253, 8
      %s255 = scalar_lea.vmem %s5, %s254
      %s256 = sadd.s32 %s21, %s23
      %s257 = smul.u32 2, %s256
      %p258 = scmp.lt.s32.totalorder %s22, 1
      %s259 = scalar_select %p258, %s22, 1
      %p260 = scmp.lt.s32.totalorder %s257, 1
      %s261 = scalar_select %p260, %s257, 1
      %s262 = smul.addr %s259, 2
      %s263 = sadd.s32 %s261, %s262
      %s264 = smul.addr %s263, 4
      %s265 = scalar_lea.vmem %s0, %s264
      %s266 = sadd.s32 %s21, %s23
      %s267 = smul.u32 2, %s266
      %s268 = smul.u32 %s21, 2
      %s269 = sadd.s32 %s268, %s22
      %p270 = scmp.lt.s32.totalorder %s269, 1
      %s271 = scalar_select %p270, %s269, 1
      %s272 = smul.addr %s271, 2
      %s273 = smul.addr %s272, 8
      %s274 = scalar_lea.vmem %s5, %s273
      %s275 = smul.u32 %s21, 2
      %s276 = sadd.s32 %s275, %s22
      %p277 = scmp.eq.s32.totalorder %s23, 0
      // Predicated region
      $region41: #{tpu_custom_call.1} parent=39 // pred_check
        %p278 = pneg %p277
      $region42: #{tpu_custom_call.1} parent=39 // pred_check_branch
        %280 = sbr.rel (%p278) target = $region44
      $region43: #{tpu_custom_call.1} parent=39 // pred_region
        %vm281 = vcmask 64512
        %282 = vst.msk [vmem:[%s274] sm:$0xff] %vm281, 0.0
        %283 = vst.msk [vmem:[%s274 + $0x8] sm:$0xff] %vm281, 0.0
      $region44: #{tpu_custom_call.1} parent=39 // pred_fallthru
        _
      %v284 = vld [vmem:[%s265] sm:$0xff]
      %v285 = vld [vmem:[%s1] sm:$0xff]
      %v286 = vld [vmem:[%s1 + $0x8] sm:$0xff]
      %v287 = vld [vmem:[%s1 + $0x10] sm:$0xff]
      %v288 = vld [vmem:[%s2] sm:$0xff]
      %v289 = vld [vmem:[%s2 + $0x8] sm:$0xff]
      %v290 = vld [vmem:[%s2 + $0x10] sm:$0xff]
      %292 = vset.pattern.permute.xlu0 0
      %293 = vperm.xlu0 %292, %v288
      %v294 = vpop.permute.xlu0 %293
      %297 = vset.pattern.permute.xlu0 0
      %298 = vperm.xlu0 %297, %v289
      %v299 = vpop.permute.xlu0 %298
      %302 = vset.pattern.permute.xlu0 0
      %303 = vperm.xlu0 %302, %v290
      %v304 = vpop.permute.xlu0 %303
      %v307 = vcombine.high %v284, %v284
      %vm308 = vcmask 31744
      %v310 = vsel %vm308, %v285, 0
      %v313 = vsel %vm308, %v286, 0
      %v316 = vsel %vm308, %v287, 0
      %vm318 = vcmask 1043456
      %v319 = vsel %vm318, %v284, 0
      %v321 = vsel %vm318, %v307, 0
      %323 = vmatprep.subr.mxu0 %v321
      %324 = vmatpush1.msra.mxu0 %v319
      %325 = vmatprep.subr.mxu0 0.0
      %326 = vmatpush1.msra.mxu0 0.0
      %327 = vmatprep.subr.mxu0 0.0
      %328 = vmatpush1.msra.mxu0 0.0
      %329 = vmatprep.subr.mxu0 0.0
      %330 = vmatpush1.msra.mxu0 0.0
      %331 = vmatprep.subr.mxu0 0.0
      %332 = vmatpush1.msra.mxu0 0.0
      %333 = vmatprep.subr.mxu0 0.0
      %334 = vmatpush1.msra.mxu0 0.0
      %335 = vmatprep.subr.mxu0 0.0
      %336 = vmatpush1.msra.mxu0 0.0
      %337 = vmatprep.subr.mxu0 0.0
      %338 = vmatpush1.msra.mxu0 0.0
      %339 = vmatprep.subr.mxu0 0.0
      %340 = vmatpush1.msra.mxu0 0.0
      %341 = vmatprep.subr.mxu0 0.0
      %342 = vmatpush1.msra.mxu0 0.0
      %343 = vmatprep.subr.mxu0 0.0
      %344 = vmatpush1.msra.mxu0 0.0
      %345 = vmatprep.subr.mxu0 0.0
      %346 = vmatpush1.msra.mxu0 0.0
      %347 = vmatprep.subr.mxu0 0.0
      %348 = vmatpush1.msra.mxu0 0.0
      %349 = vmatprep.subr.mxu0 0.0
      %350 = vmatpush1.msra.mxu0 0.0
      %351 = vmatprep.subr.mxu0 0.0
      %352 = vmatpush1.msra.mxu0 0.0
      %353 = vmatprep.subr.mxu0 0.0
      %354 = vmatpush1.msra.mxu0 0.0
      %355 = vmatprep.subr.mxu0 0.0
      %356 = vmatpush1.msra.mxu0 0.0
      %357 = vmatprep.subr.mxu0 0.0
      %358 = vmatpush1.msra.mxu0 0.0
      %359 = vmatprep.subr.mxu0 0.0
      %360 = vmatpush1.msra.mxu0 0.0
      %361 = vmatprep.subr.mxu0 0.0
      %362 = vmatpush1.msra.mxu0 0.0
      %363 = vmatprep.subr.mxu0 0.0
      %364 = vmatpush1.msra.mxu0 0.0
      %365 = vmatprep.subr.mxu0 0.0
      %366 = vmatpush1.msra.mxu0 0.0
      %367 = vmatprep.subr.mxu0 0.0
      %368 = vmatpush1.msra.mxu0 0.0
      %369 = vmatprep.subr.mxu0 0.0
      %370 = vmatpush1.msra.mxu0 0.0
      %371 = vmatprep.subr.mxu0 0.0
      %372 = vmatpush1.msra.mxu0 0.0
      %373 = vmatprep.subr.mxu0 0.0
      %374 = vmatpush1.msra.mxu0 0.0
      %375 = vmatprep.subr.mxu0 0.0
      %376 = vmatpush1.msra.mxu0 0.0
      %377 = vmatprep.subr.mxu0 0.0
      %378 = vmatpush1.msra.mxu0 0.0
      %379 = vmatprep.subr.mxu0 0.0
      %380 = vmatpush1.msra.mxu0 0.0
      %381 = vmatprep.subr.mxu0 0.0
      %382 = vmatpush1.msra.mxu0 0.0
      %383 = vmatprep.subr.mxu0 0.0
      %384 = vmatpush1.msra.mxu0 0.0
      %385 = vmatprep.subr.mxu0 0.0
      %386 = vmatpush1.msra.mxu0 0.0
      %387 = vmatprep.mubr.f32.mxu0 0.0
      %388 = vmatmul.mubr.f32.gmra.mrb[0].mxu0 %v310
      %v389 = vpop.f32.mrb[0].mxu0
      %v390 = vadd.f32 %v294, %v389
      %v391 = vpop.f32.mrb[0].mxu0
      %v392 = vadd.f32 %v294, %v391
      %393 = vmatprep.mubr.f32.mxu0 0.0
      %394 = vmatmul.mubr.f32.gmra.mrb[0].mxu0 %v313
      %v395 = vpop.f32.mrb[0].mxu0
      %v396 = vadd.f32 %v299, %v395
      %v397 = vpop.f32.mrb[0].mxu0
      %v398 = vadd.f32 %v299, %v397
      %399 = vmatprep.mubr.f32.mxu0 0.0
      %400 = vmatmul.mubr.f32.gmra.mrb[0].mxu0 %v316
      %v401 = vpop.f32.mrb[0].mxu0
      %v402 = vadd.f32 %v304, %v401
      %v403 = vpop.f32.mrb[0].mxu0
      %v404 = vadd.f32 %v304, %v403
      %405 = vdwg.mxu0
      %v406 = vmax.f32 %v390, 0.0
      %v407 = vmax.f32 %v392, 0.0
      %v408 = vmax.f32 %v396, 0.0
      %v409 = vmax.f32 %v398, 0.0
      %v410 = vmax.f32 %v402, 0.0
      %v411 = vmax.f32 %v404, 0.0
      %v412 = vld [vmem:[%s3] sm:$0xff]
      %v413 = vld [vmem:[%s4] sm:$0xff]
      %415 = vset.pattern.permute.xlu0 0
      %416 = vperm.xlu0 %415, %v413
      %v417 = vpop.permute.xlu0 %416
      %vm419 = vcmask 64512
      %v421 = vsel %vm419, %v412, 0
      %423 = vmatprep.subr.mxu0 %v407
      %424 = vmatpush1.msra.mxu0 %v406
      %425 = vmatprep.subr.mxu0 0.0
      %426 = vmatpush1.msra.mxu0 0.0
      %427 = vmatprep.subr.mxu0 0.0
      %428 = vmatpush1.msra.mxu0 0.0
      %429 = vmatprep.subr.mxu0 0.0
      %430 = vmatpush1.msra.mxu0 0.0
      %431 = vmatprep.subr.mxu0 0.0
      %432 = vmatpush1.msra.mxu0 0.0
      %433 = vmatprep.subr.mxu0 0.0
      %434 = vmatpush1.msra.mxu0 0.0
      %435 = vmatprep.subr.mxu0 0.0
      %436 = vmatpush1.msra.mxu0 0.0
      %437 = vmatprep.subr.mxu0 0.0
      %438 = vmatpush1.msra.mxu0 0.0
      %439 = vmatprep.subr.mxu0 0.0
      %440 = vmatpush1.msra.mxu0 0.0
      %441 = vmatprep.subr.mxu0 0.0
      %442 = vmatpush1.msra.mxu0 0.0
      %443 = vmatprep.subr.mxu0 0.0
      %444 = vmatpush1.msra.mxu0 0.0
      %445 = vmatprep.subr.mxu0 0.0
      %446 = vmatpush1.msra.mxu0 0.0
      %447 = vmatprep.subr.mxu0 0.0
      %448 = vmatpush1.msra.mxu0 0.0
      %449 = vmatprep.subr.mxu0 0.0
      %450 = vmatpush1.msra.mxu0 0.0
      %451 = vmatprep.subr.mxu0 0.0
      %452 = vmatpush1.msra.mxu0 0.0
      %453 = vmatprep.subr.mxu0 0.0
      %454 = vmatpush1.msra.mxu0 0.0
      %455 = vmatprep.subr.mxu0 0.0
      %456 = vmatpush1.msra.mxu0 0.0
      %457 = vmatprep.subr.mxu0 0.0
      %458 = vmatpush1.msra.mxu0 0.0
      %459 = vmatprep.subr.mxu0 0.0
      %460 = vmatpush1.msra.mxu0 0.0
      %461 = vmatprep.subr.mxu0 0.0
      %462 = vmatpush1.msra.mxu0 0.0
      %463 = vmatprep.subr.mxu0 0.0
      %464 = vmatpush1.msra.mxu0 0.0
      %465 = vmatprep.subr.mxu0 0.0
      %466 = vmatpush1.msra.mxu0 0.0
      %467 = vmatprep.subr.mxu0 0.0
      %468 = vmatpush1.msra.mxu0 0.0
      %469 = vmatprep.subr.mxu0 0.0
      %470 = vmatpush1.msra.mxu0 0.0
      %471 = vmatprep.subr.mxu0 0.0
      %472 = vmatpush1.msra.mxu0 0.0
      %473 = vmatprep.subr.mxu0 0.0
      %474 = vmatpush1.msra.mxu0 0.0
      %475 = vmatprep.subr.mxu0 0.0
      %476 = vmatpush1.msra.mxu0 0.0
      %477 = vmatprep.subr.mxu0 0.0
      %478 = vmatpush1.msra.mxu0 0.0
      %479 = vmatprep.subr.mxu0 0.0
      %480 = vmatpush1.msra.mxu0 0.0
      %481 = vmatprep.subr.mxu0 0.0
      %482 = vmatpush1.msra.mxu0 0.0
      %483 = vmatprep.subr.mxu0 0.0
      %484 = vmatpush1.msra.mxu0 0.0
      %485 = vmatprep.subr.mxu0 0.0
      %486 = vmatpush1.msra.mxu0 0.0
      %487 = vmatprep.mubr.f32.mxu0 0.0
      %488 = vmatmul.mubr.f32.gmra.mrb[0].mxu0 %v421
      %v489 = vpop.f32.mrb[0].mxu0
      %v490 = vadd.f32 %v417, %v489
      %v491 = vpop.f32.mrb[0].mxu0
      %v492 = vadd.f32 %v417, %v491
      %493 = vdwg.mxu0
      %vm494 = vcmp.gt.f32.partialorder %v490, 20.0
      %vm495 = vcmp.gt.f32.partialorder %v492, 20.0
      %v496 = vmin.f32 %v490, 20.0
      %v497 = vmin.f32 %v492, 20.0
      %v498 = vmul.f32 %v496, 1.442695
      %v499 = vpow.pop %v498
      %v500 = vmul.f32 %v497, 1.442695
      %v501 = vpow.pop %v500
      %v502 = vadd.f32 %v499, 1.0
      %v503 = vlog2.pop %v502
      %v504 = vmul.f32 %v503, 0.6931472
      %v505 = vmul.f32 -0.5, %v499
      %v506 = vadd.f32 %v505, 1.0
      %v507 = vmul.f32 %v506, %v499
      %v508 = vand.u32 2147483647, %v499
      %vm509 = vcmp.lt.f32.partialorder %v508, 0.0004427343
      %v510 = vsel %vm509, %v507, %v504
      %v511 = vadd.f32 %v501, 1.0
      %v512 = vlog2.pop %v511
      %v513 = vmul.f32 %v512, 0.6931472
      %v514 = vmul.f32 -0.5, %v501
      %v515 = vadd.f32 %v514, 1.0
      %v516 = vmul.f32 %v515, %v501
      %v517 = vand.u32 2147483647, %v501
      %vm518 = vcmp.lt.f32.partialorder %v517, 0.0004427343
      %v519 = vsel %vm518, %v516, %v513
      %v520 = vsel %vm494, %v490, %v510
      %v521 = vsel %vm495, %v492, %v519
      %v522 = vld [vmem:[%s274] sm:$0xff]
      %v523 = vld [vmem:[%s274 + $0x8] sm:$0xff]
      %524 = vmatprep.subr.mxu0 %v521
      %525 = vmatpush1.xpose.msra.mxu0 %v520
      %526 = vmatprep.subr.mxu0 0.0
      %527 = vmatpush1.xpose.msra.mxu0 0.0
      %528 = vmatprep.subr.mxu0 0.0
      %529 = vmatpush1.xpose.msra.mxu0 0.0
      %530 = vmatprep.subr.mxu0 0.0
      %531 = vmatpush1.xpose.msra.mxu0 0.0
      %532 = vmatprep.subr.mxu0 0.0
      %533 = vmatpush1.xpose.msra.mxu0 0.0
      %534 = vmatprep.subr.mxu0 0.0
      %535 = vmatpush1.xpose.msra.mxu0 0.0
      %536 = vmatprep.subr.mxu0 0.0
      %537 = vmatpush1.xpose.msra.mxu0 0.0
      %538 = vmatprep.subr.mxu0 0.0
      %539 = vmatpush1.xpose.msra.mxu0 0.0
      %540 = vmatprep.subr.mxu0 0.0
      %541 = vmatpush1.xpose.msra.mxu0 0.0
      %542 = vmatprep.subr.mxu0 0.0
      %543 = vmatpush1.xpose.msra.mxu0 0.0
      %544 = vmatprep.subr.mxu0 0.0
      %545 = vmatpush1.xpose.msra.mxu0 0.0
      %546 = vmatprep.subr.mxu0 0.0
      %547 = vmatpush1.xpose.msra.mxu0 0.0
      %548 = vmatprep.subr.mxu0 0.0
      %549 = vmatpush1.xpose.msra.mxu0 0.0
      %550 = vmatprep.subr.mxu0 0.0
      %551 = vmatpush1.xpose.msra.mxu0 0.0
      %552 = vmatprep.subr.mxu0 0.0
      %553 = vmatpush1.xpose.msra.mxu0 0.0
      %554 = vmatprep.subr.mxu0 0.0
      %555 = vmatpush1.xpose.msra.mxu0 0.0
      %556 = vmatprep.subr.mxu0 0.0
      %557 = vmatpush1.xpose.msra.mxu0 0.0
      %558 = vmatprep.subr.mxu0 0.0
      %559 = vmatpush1.xpose.msra.mxu0 0.0
      %560 = vmatprep.subr.mxu0 0.0
      %561 = vmatpush1.xpose.msra.mxu0 0.0
      %562 = vmatprep.subr.mxu0 0.0
      %563 = vmatpush1.xpose.msra.mxu0 0.0
      %564 = vmatprep.subr.mxu0 0.0
      %565 = vmatpush1.xpose.msra.mxu0 0.0
      %566 = vmatprep.subr.mxu0 0.0
      %567 = vmatpush1.xpose.msra.mxu0 0.0
      %568 = vmatprep.subr.mxu0 0.0
      %569 = vmatpush1.xpose.msra.mxu0 0.0
      %570 = vmatprep.subr.mxu0 0.0
      %571 = vmatpush1.xpose.msra.mxu0 0.0
      %572 = vmatprep.subr.mxu0 0.0
      %573 = vmatpush1.xpose.msra.mxu0 0.0
      %574 = vmatprep.subr.mxu0 0.0
      %575 = vmatpush1.xpose.msra.mxu0 0.0
      %576 = vmatprep.subr.mxu0 0.0
      %577 = vmatpush1.xpose.msra.mxu0 0.0
      %578 = vmatprep.subr.mxu0 0.0
      %579 = vmatpush1.xpose.msra.mxu0 0.0
      %580 = vmatprep.subr.mxu0 0.0
      %581 = vmatpush1.xpose.msra.mxu0 0.0
      %582 = vmatprep.subr.mxu0 0.0
      %583 = vmatpush1.xpose.msra.mxu0 0.0
      %584 = vmatprep.subr.mxu0 0.0
      %585 = vmatpush1.xpose.msra.mxu0 0.0
      %586 = vmatprep.subr.mxu0 0.0
      %587 = vmatpush1.xpose.msra.mxu0 0.0
      %588 = vmatprep.mubr.f32.mxu0 %v409
      %589 = vmatmul.mubr.f32.gmra.mrb[0].mxu0 %v408
      %v590 = vpop.f32.mrb[0].mxu0
      %v591 = vadd.f32 0.0, %v590
      %v592 = vpop.f32.mrb[0].mxu0
      %593 = vmatprep.mubr.f32.mxu0 %v411
      %594 = vmatmul.mubr.f32.gmra.mrb[0].mxu0 %v410
      %v595 = vpop.f32.mrb[0].mxu0
      %v596 = vadd.f32 0.0, %v595
      %v597 = vpop.f32.mrb[0].mxu0
      %598 = vdwg.mxu0
      %v599 = vadd.f32 %v522, %v591
      %v600 = vadd.f32 %v523, %v596
      %601 = vst.msk [vmem:[%s274] sm:$0xff] %vm419, %v599
      %602 = vst.msk [vmem:[%s274 + $0x8] sm:$0xff] %vm419, %v600
      %s603 = smul.u32 %s21, 2
      %s604 = sadd.s32 %s603, %s22
      %p605 = scmp.lt.s32.totalorder %s604, 1
      %s606 = scalar_select %p605, %s604, 1
      %s607 = smul.addr %s606, 2
      %s608 = smul.addr %s607, 8
      %s609 = scalar_lea.vmem %s5, %s608
      // Predicated region
      $region45: #{tpu_custom_call.1} parent=39 // pred_check
        %p610 = pneg %p171
      $region46: #{tpu_custom_call.1} parent=39 // pred_check_branch
        %612 = sbr.rel (%p610) target = $region48
      $region47: #{tpu_custom_call.1} parent=39 // pred_region
        %s613 = smul.u32 %s21, 2
        %s614 = sadd.s32 %s613, %s22
      $region48: #{tpu_custom_call.1} parent=39 // pred_fallthru
        _
    $region40: #{tpu_custom_call.1} parent=5 // pred_fallthru
      _
    %p615 = scmp.le.s32.totalorder 2, %s11
    // Predicated region
    $region49: #{tpu_custom_call.1} parent=5 // pred_check
      %p616 = pneg %p615
    $region50: #{tpu_custom_call.1} parent=5 // pred_check_branch
      %618 = sbr.rel (%p616) target = $region52
    $region51: #{tpu_custom_call.1} parent=5 // pred_region
      %s619 = ssub.s32 %s11, 2
      // Predicated region
      $region53: #{tpu_custom_call.1} parent=51 // pred_check
        %p620 = pneg %p177
      $region54: #{tpu_custom_call.1} parent=51 // pred_check_branch
        %622 = sbr.rel (%p620) target = $region56
      $region55: #{tpu_custom_call.1} parent=51 // pred_region
        %s623 = smul.u32 %s24, 2
        %s624 = sadd.s32 %s623, %s25
        %p625 = scmp.lt.s32.totalorder %s624, 1
        %s626 = scalar_select %p625, %s624, 1
        %s627 = smul.addr %s626, 2
        %s628 = smul.addr %s627, 8
        %s629 = scalar_lea.vmem %s5, %s628
      $region56: #{tpu_custom_call.1} parent=51 // pred_fallthru
        _
    $region52: #{tpu_custom_call.1} parent=5 // pred_fallthru
      _
  $region6: #{tpu_custom_call.1} parent=0 // loop_footer
    %s15 = sadd.s32 1, %s11
  $region7: #{tpu_custom_call.1} parent=0 // loop_footer_branch
    %10 = sbr.rel target = $region3
  $region8: #{tpu_custom_call.1} parent=0 // loop_exit
    _

</llo_original>
